<compile_context>
chip_gen: v5e
topology: v5e:2x2
jax: 0.10.0
libtpu: 0.0.40
codegen_flags: <defaults>
</compile_context>

<pallas_src>
import functools

import jax
import jax.numpy as jnp
import numpy as np
from jax.experimental import pallas as pl
from jax.experimental.pallas import tpu as pltpu


_TM = 256       # row tile; >=256 keeps the 256-wide MXU passes full on v6e/v7x
_LANE = 128


# ----------------------------------------------------------------------------
# Helpers
# ----------------------------------------------------------------------------
def _pad_up(n, mult=_LANE):
    return ((n + mult - 1) // mult) * mult


def _pad2d(w, rows, cols):
    return jnp.pad(w, ((0, rows - w.shape[0]), (0, cols - w.shape[1])))


def _vmem_limit(*blocks):
    """Explicit scoped-VMEM limit: 2x resident blocks (double-buffer) + headroom."""
    est = 0
    for shape, dtype in blocks:
        est += int(np.prod(shape)) * int(np.dtype(dtype).itemsize)
    est = 2 * est + (8 << 20)                     # f32 temps / spill headroom
    return int(min(max(est, 16 << 20), 48 << 20))  # stay under v7x's 64 MiB


# ----------------------------------------------------------------------------
# Kernels
# ----------------------------------------------------------------------------
def _fc1_kernel(x_ref, w_ref, b_ref, invdeg_ref, out_ref):
    # fc1 (no activation, matching the reference).  Output rows are pre-scaled
    # by 1/deg so the next propagation matmul is simply A @ xs.
    h = jnp.dot(x_ref[...], w_ref[...], preferred_element_type=jnp.float32)
    h = h + b_ref[...]
    out_ref[...] = (h * invdeg_ref[...]).astype(out_ref.dtype)


def _gcn_mid_layer_kernel(n_w, adj_ref, xs_ref, invdeg_ref, *rest):
    w_refs = rest[:n_w]
    out_ref = rest[n_w]
    # int8 (0/1) adjacency row-tile -> bf16 for the MXU (cheap upcast hidden
    # under the matmul; MXU inputs must be bf16 on v7x).
    a = adj_ref[...].astype(jnp.float32).astype(jnp.bfloat16)
    h = jnp.dot(a, xs_ref[...], preferred_element_type=jnp.float32)
    for w_ref in w_refs:                      # message MLP: ReLU after every
        h = jnp.dot(h.astype(jnp.bfloat16), w_ref[...],   # linear, incl. the
                    preferred_element_type=jnp.float32)   # last (reference)
        h = jnp.maximum(h, 0.0)
    # Pre-scale by 1/deg for the next layer's propagation (f32 epilogue).
    out_ref[...] = (h * invdeg_ref[...]).astype(out_ref.dtype)


def _gcn_last_layer_kernel(n_w, n_classes, adj_ref, xs_ref, *rest):
    w_refs = rest[:n_w]
    w2_ref, b2_ref, out_ref = rest[n_w], rest[n_w + 1], rest[n_w + 2]
    a = adj_ref[...].astype(jnp.float32).astype(jnp.bfloat16)
    h = jnp.dot(a, xs_ref[...], preferred_element_type=jnp.float32)
    for w_ref in w_refs:
        h = jnp.dot(h.astype(jnp.bfloat16), w_ref[...],
                    preferred_element_type=jnp.float32)
        h = jnp.maximum(h, 0.0)
    # fc2 + log_softmax fused (row-local; mask-row selection happens outside).
    logits = jnp.dot(h.astype(jnp.bfloat16), w2_ref[...],
                     preferred_element_type=jnp.float32) + b2_ref[...]
    lane = jax.lax.broadcasted_iota(jnp.int32, logits.shape, 1)
    z = jnp.where(lane < n_classes, logits, jnp.full_like(logits, -1e30))
    zmax = jnp.max(z, axis=-1, keepdims=True)
    s = z - zmax
    lse = jnp.log(jnp.sum(jnp.exp(s), axis=-1, keepdims=True))
    out_ref[...] = (s - lse).astype(out_ref.dtype)


# ----------------------------------------------------------------------------
# GCN forward (dense path of the PyTorch module).
# ----------------------------------------------------------------------------
class GCNPallas:
    def __init__(self, input_size, message_sizes, message_mlp_sizes,
                 num_classes, key):
        assert len(input_size) == 2
        self.input_size = input_size
        self.message_sizes = message_sizes
        self.message_mlp_sizes = message_mlp_sizes
        self.num_classes = num_classes
        self.nLayers = len(message_sizes)
        self.n_mlp = len(message_mlp_sizes)

        # lane-aligned (padded) channel dims
        self.kp = _pad_up(input_size[0])      # fc1 contraction dim
        self.hp = _pad_up(input_size[1])      # fc1 output dim
        self.cp = _pad_up(num_classes)        # fc2 output dim

        keys = iter(jax.random.split(key, 64))

        # fc1: Linear(input_size[0] -> input_size[1]); stored as (in, out).
        w_fc1 = jax.random.normal(next(keys), (input_size[0], input_size[1]),
                                  jnp.float32) * 0.1
        b_fc1 = jax.random.normal(next(keys), (input_size[1],),
                                  jnp.float32) * 0.1
        self.w_fc1_p = _pad2d(w_fc1, self.kp, self.hp).astype(jnp.bfloat16)
        self.b_fc1_p = _pad2d(b_fc1.reshape(1, -1), 1, self.hp)        # f32

        # message MLP weights (torch.randn style), zero-padded in both dims
        # so padded channels stay exactly zero through the ReLU chain.
        self.msg_w_p = []       # list (per layer) of lists of padded weights
        self.layer_in_p = []
        self.layer_out_p = []
        for layer in range(self.nLayers):
            d1 = input_size[1] if layer == 0 else message_sizes[layer - 1]
            d2 = message_sizes[layer]
            self.layer_in_p.append(_pad_up(d1))
            self.layer_out_p.append(_pad_up(d2))
            ws = []
            for l in range(self.n_mlp + 1):
                n1 = d1 if l == 0 else message_mlp_sizes[l - 1]
                n2 = d2 if l == self.n_mlp else message_mlp_sizes[l]
                w = jax.random.normal(next(keys), (n1, n2), jnp.float32) * 0.1
                ws.append(_pad2d(w, _pad_up(n1), _pad_up(n2)).astype(
                    jnp.bfloat16))
            self.msg_w_p.append(ws)

        # fc2: Linear(message_sizes[-1] -> num_classes); stored as (in, out).
        dlast = message_sizes[-1]
        w_fc2 = jax.random.normal(next(keys), (dlast, num_classes),
                                  jnp.float32) * 0.1
        b_fc2 = jax.random.normal(next(keys), (num_classes,),
                                  jnp.float32) * 0.1
        self.w_fc2_p = _pad2d(w_fc2, _pad_up(dlast), self.cp).astype(
            jnp.bfloat16)
        self.b_fc2_p = _pad2d(b_fc2.reshape(1, -1), 1, self.cp)        # f32

    # ------------------------------------------------------------------ fc1
    def _fc1_call(self, feat_p, inv_deg):
        n_pad = feat_p.shape[0]
        grid = (n_pad // _TM,)
        in_specs = [
            pl.BlockSpec((_TM, self.kp), lambda i: (i, 0)),      # X row tile
            pl.BlockSpec((self.kp, self.hp), lambda i: (0, 0)),  # W1 resident
            pl.BlockSpec((1, self.hp), lambda i: (0, 0)),        # b1 resident
            pl.BlockSpec((_TM, 1), lambda i: (i, 0)),            # 1/deg tile
        ]
        out_spec = pl.BlockSpec((_TM, self.hp), lambda i: (i, 0))
        limit = _vmem_limit(((_TM, self.kp), jnp.bfloat16),
                            ((self.kp, self.hp), jnp.bfloat16),
                            ((1, self.hp), jnp.float32),
                            ((_TM, 1), jnp.float32),
                            ((_TM, self.hp), jnp.bfloat16))
        return pl.pallas_call(
            _fc1_kernel,
            out_shape=jax.ShapeDtypeStruct((n_pad, self.hp), jnp.bfloat16),
            grid_spec=pltpu.PrefetchScalarGridSpec(
                num_scalar_prefetch=0, grid=grid,
                in_specs=in_specs, out_specs=out_spec),
            compiler_params=pltpu.CompilerParams(
                dimension_semantics=("parallel",),
                vmem_limit_bytes=limit),
        )(feat_p, self.w_fc1_p, self.b_fc1_p, inv_deg)

    # --------------------------------------------------- middle GCN layers
    def _mid_layer_call(self, layer, adj_i8, xs, inv_deg):
        n_pad = adj_i8.shape[0]
        grid = (n_pad // _TM,)
        hin_p = self.layer_in_p[layer]
        hout_p = self.layer_out_p[layer]
        w_list = self.msg_w_p[layer]
        n_w = len(w_list)
        in_specs = [
            pl.BlockSpec((_TM, n_pad), lambda i: (i, 0)),    # adjacency tile (int8)
            pl.BlockSpec((n_pad, hin_p), lambda i: (0, 0)),  # prev activations, resident
            pl.BlockSpec((_TM, 1), lambda i: (i, 0)),        # 1/deg tile
        ] + [pl.BlockSpec(w.shape, lambda i: (0, 0)) for w in w_list]
        out_spec = pl.BlockSpec((_TM, hout_p), lambda i: (i, 0))
        limit = _vmem_limit(((_TM, n_pad), jnp.int8),
                            ((n_pad, hin_p), jnp.bfloat16),
                            ((_TM, 1), jnp.float32),
                            *[(w.shape, jnp.bfloat16) for w in w_list],
                            ((_TM, hout_p), jnp.bfloat16),
                            ((_TM, n_pad), jnp.float32))     # in-kernel upcast temp
        kernel = functools.partial(_gcn_mid_layer_kernel, n_w)
        return pl.pallas_call(
            kernel,
            out_shape=jax.ShapeDtypeStruct((n_pad, hout_p), jnp.bfloat16),
            grid_spec=pltpu.PrefetchScalarGridSpec(
                num_scalar_prefetch=0, grid=grid,
                in_specs=in_specs, out_specs=out_spec),
            compiler_params=pltpu.CompilerParams(
                dimension_semantics=("parallel",),
                vmem_limit_bytes=limit),
        )(adj_i8, xs, inv_deg, *w_list)

    # ------------------------------------- last GCN layer + fc2 + log_softmax
    def _last_layer_call(self, adj_i8, xs):
        n_pad = adj_i8.shape[0]
        grid = (n_pad // _TM,)
        hin_p = self.layer_in_p[-1]
        w_list = self.msg_w_p[-1]
        n_w = len(w_list)
        in_specs = [
            pl.BlockSpec((_TM, n_pad), lambda i: (i, 0)),
            pl.BlockSpec((n_pad, hin_p), lambda i: (0, 0)),
        ] + [pl.BlockSpec(w.shape, lambda i: (0, 0)) for w in w_list] + [
            pl.BlockSpec(self.w_fc2_p.shape, lambda i: (0, 0)),
            pl.BlockSpec((1, self.cp), lambda i: (0, 0)),
        ]
        out_spec = pl.BlockSpec((_TM, self.cp), lambda i: (i, 0))
        limit = _vmem_limit(((_TM, n_pad), jnp.int8),
                            ((n_pad, hin_p), jnp.bfloat16),
                            *[(w.shape, jnp.bfloat16) for w in w_list],
                            (self.w_fc2_p.shape, jnp.bfloat16),
                            ((1, self.cp), jnp.float32),
                            ((_TM, self.cp), jnp.float32),
                            ((_TM, n_pad), jnp.float32))
        kernel = functools.partial(_gcn_last_layer_kernel, n_w,
                                   self.num_classes)
        return pl.pallas_call(
            kernel,
            out_shape=jax.ShapeDtypeStruct((n_pad, self.cp), jnp.float32),
            grid_spec=pltpu.PrefetchScalarGridSpec(
                num_scalar_prefetch=0, grid=grid,
                in_specs=in_specs, out_specs=out_spec),
            compiler_params=pltpu.CompilerParams(
                dimension_semantics=("parallel",),
                vmem_limit_bytes=limit),
        )(adj_i8, xs, *w_list, self.w_fc2_p, self.b_fc2_p)

    # ----------------------------------------------------------------- fwd
    def forward(self, dense_adj, dense_feature, mask_indices):
        N = dense_adj.shape[0]
        n_pad = _pad_up(N, _TM)      # multiple of 256 (rows and contraction dim)

        # int8 storage of the (binary 0/1) adjacency: halves HBM/VMEM bytes of
        # the dominant N^2 operand; upcast to bf16 happens in-kernel.
        # TODO(synk): fall back to bf16 storage for weighted adjacencies.
        adj_i8 = jnp.pad(dense_adj.astype(jnp.int8),
                         ((0, n_pad - N), (0, n_pad - N)))

        # deg = (A + I).sum(1) exactly as the reference (propagation itself
        # uses A without the self loop, also matching the reference).  Row
        # sums are taken over the already-downcast int8 adjacency — no extra
        # f32 N^2 pass in the wrapper.
        deg = jnp.sum(adj_i8, axis=1, dtype=jnp.int32).astype(jnp.float32) + 1.0
        inv_deg = (1.0 / deg).reshape(n_pad, 1)

        feat_p = jnp.pad(
            dense_feature.astype(jnp.float32),
            ((0, n_pad - N), (0, self.kp - dense_feature.shape[1]))
        ).astype(jnp.bfloat16)

        # Stage 1: fc1 (output pre-scaled by 1/deg for the first propagation).
        xs = self._fc1_call(feat_p, inv_deg)
        # Stages 2..nLayers: propagation + message MLP per layer.
        for layer in range(self.nLayers - 1):
            xs = self._mid_layer_call(layer, adj_i8, xs, inv_deg)
        out_full = self._last_layer_call(adj_i8, xs)

        # Row selection + class-lane de-pad (row-local ops => identical to
        # selecting before fc2/log_softmax as the reference does).
        return out_full[mask_indices, :self.num_classes]


if __name__ == "__main__":
    key = jax.random.PRNGKey(0)
    k_adj, k_feat, k_params = jax.random.split(key, 3)

    # Small synthetic graph.
    N_NODES = 256
    INPUT_SIZE = (64, 128)        # (raw feature dim, hidden dim)
    MESSAGE_SIZES = [128, 64]
    MESSAGE_MLP_SIZES = [96]
    NUM_CLASSES = 16

    # Random symmetric 0/1 adjacency.
    a = (jax.random.uniform(k_adj, (N_NODES, N_NODES)) < 0.05).astype(
        jnp.float32)
    dense_adj = jnp.maximum(a, a.T)

    dense_feature = jax.random.normal(
        k_feat, (N_NODES, INPUT_SIZE[0]), jnp.float32)

    # "train" split mask: every 4th node plus one extra (ragged count is fine).
    mask = np.zeros(N_NODES, dtype=bool)
    mask[::4] = True
    mask[3] = True
    mask_indices = np.nonzero(mask)[0]

    model = GCNPallas(INPUT_SIZE, MESSAGE_SIZES, MESSAGE_MLP_SIZES,
                      NUM_CLASSES, k_params)

    out = model.forward(dense_adj, dense_feature, mask_indices)
    out = jax.block_until_ready(out)

    assert out.shape == (mask_indices.shape[0], NUM_CLASSES)
    # Sanity: rows of log_softmax should exp-sum to ~1.
    row_sums = np.asarray(jnp.sum(jnp.exp(out), axis=-1))
    assert np.allclose(row_sums, 1.0, atol=1e-4)
    assert np.all(np.isfinite(np.asarray(out)))

    print("KERNEL_OK")
</pallas_src>

<mosaic_0001>
module attributes {stable_mosaic.version = 11 : i64} {
  func.func @_fc1_kernel(%arg0: i32, %arg1: memref<256x128xbf16, #tpu.memory_space<vmem>>, %arg2: memref<128x128xbf16, #tpu.memory_space<vmem>>, %arg3: memref<1x128xf32, #tpu.memory_space<vmem>>, %arg4: memref<256x1xf32, #tpu.memory_space<vmem>>, %arg5: memref<256x128xbf16, #tpu.memory_space<vmem>>) attributes {dimension_semantics = [#tpu.dimension_semantics<parallel>], iteration_bounds = array<i64: 1>, scalar_prefetch = 0 : i64, scratch_operands = 0 : i64, tpu.core_type = #tpu.core_type<tc>, window_params = [{transform_indices = @transform_0, window_bounds = array<i64: 256, 128>}, {pipeline_mode = #tpu.pipeline_mode<synchronous>, transform_indices = @transform_1, window_bounds = array<i64: 128, 128>}, {pipeline_mode = #tpu.pipeline_mode<synchronous>, transform_indices = @transform_2, window_bounds = array<i64: 1, 128>}, {transform_indices = @transform_3, window_bounds = array<i64: 256, 1>}, {transform_indices = @transform_4, window_bounds = array<i64: 256, 128>}]} {
    %c0 = arith.constant 0 : index
    %c0_0 = arith.constant 0 : index
    %0 = vector.load %arg1[%c0, %c0_0] : memref<256x128xbf16, #tpu.memory_space<vmem>>, vector<256x128xbf16>
    %c0_1 = arith.constant 0 : index
    %c0_2 = arith.constant 0 : index
    %1 = vector.load %arg2[%c0_1, %c0_2] : memref<128x128xbf16, #tpu.memory_space<vmem>>, vector<128x128xbf16>
    %cst = arith.constant dense<0.000000e+00> : vector<256x128xf32>
    %2 = tpu.matmul %0, %1, %cst {dimension_numbers = #tpu.dot_dimension_numbers<[1], [0], [0], [1], [0, 0, 1, 1], [], []>} : vector<256x128xbf16>, vector<128x128xbf16>, vector<256x128xf32> -> vector<256x128xf32>
    %c0_3 = arith.constant 0 : index
    %c0_4 = arith.constant 0 : index
    %3 = vector.load %arg3[%c0_3, %c0_4] : memref<1x128xf32, #tpu.memory_space<vmem>>, vector<1x128xf32>
    %4 = vector.broadcast %3 : vector<1x128xf32> to vector<256x128xf32>
    %5 = arith.addf %2, %4 : vector<256x128xf32>
    %c0_5 = arith.constant 0 : index
    %c0_6 = arith.constant 0 : index
    %6 = vector.load %arg4[%c0_5, %c0_6] : memref<256x1xf32, #tpu.memory_space<vmem>>, vector<256x1xf32>
    %7 = vector.broadcast %6 : vector<256x1xf32> to vector<256x128xf32>
    %8 = arith.mulf %5, %7 : vector<256x128xf32>
    %9 = arith.truncf %8 : vector<256x128xf32> to vector<256x128xbf16>
    %c0_7 = arith.constant 0 : index
    %c0_8 = arith.constant 0 : index
    %10 = vector.load %arg5[%c0_7, %c0_8] : memref<256x128xbf16, #tpu.memory_space<vmem>>, vector<256x128xbf16>
    tpu.vector_store %arg5[%c0_7, %c0_8], %9 {strides = array<i32>} : memref<256x128xbf16, #tpu.memory_space<vmem>>, vector<256x128xbf16>,
    return
  }
  func.func @transform_0(%arg0: i32) -> (i32, i32) {
    %c0_i32 = arith.constant 0 : i32
    %c0_i32_0 = arith.constant 0 : i32
    return %arg0, %c0_i32 : i32, i32
  }
  func.func @transform_1(%arg0: i32) -> (i32, i32) {
    %c0_i32 = arith.constant 0 : i32
    %c0_i32_0 = arith.constant 0 : i32
    %c0_i32_1 = arith.constant 0 : i32
    return %c0_i32, %c0_i32_0 : i32, i32
  }
  func.func @transform_2(%arg0: i32) -> (i32, i32) {
    %c0_i32 = arith.constant 0 : i32
    %c0_i32_0 = arith.constant 0 : i32
    %c0_i32_1 = arith.constant 0 : i32
    return %c0_i32, %c0_i32_0 : i32, i32
  }
  func.func @transform_3(%arg0: i32) -> (i32, i32) {
    %c0_i32 = arith.constant 0 : i32
    %c0_i32_0 = arith.constant 0 : i32
    return %arg0, %c0_i32 : i32, i32
  }
  func.func @transform_4(%arg0: i32) -> (i32, i32) {
    %c0_i32 = arith.constant 0 : i32
    %c0_i32_0 = arith.constant 0 : i32
    return %arg0, %c0_i32 : i32, i32
  }
}

</mosaic_0001>

<llo_original>
// kernel: tpu_custom_call.1
$region0: #{tpu_custom_call.1}
  #allocation0 [shape = 'u32[]', space=smem, size = 0x4, offset = 0x4, fixed_abs, tag = 'smem constant byte address 0x4 - core index']
  #allocation1 [shape = 'u32[72,128]{1,0:T(1,128)}', space=vmem, size = 0x9000, scoped, tag = 'internal scratch']
  %s0 = inlined_call_operand.vmem [shape: bf16[256,128], index: 0, kind: input, shape index: {}]
  %s1 = inlined_call_operand.vmem [shape: bf16[128,128], index: 1, kind: input, shape index: {}]
  %s2 = inlined_call_operand.vmem [shape: f32[1,128], index: 2, kind: input, shape index: {}]
  %s3 = inlined_call_operand.vmem [shape: f32[256,1], index: 3, kind: input, shape index: {}]
  %s4 = inlined_call_operand.hbm [shape: bf16[256,128], index: 4, kind: output, shape index: {}]
  %s5 = sld [smem:[#allocation0]]
  $region26: #{tpu_custom_call.1} parent=0
    _
  %s7 = ssub.s32 1, %s5
  %s8 = scalar_select 0, %s7, %s5
  $region1: #{tpu_custom_call.1} parent=0
    #allocation2 [shape = 'u8[65536]{0}', space=vmem, size = 0x10000, scoped, tag = 'output window, operand 0, single buffered']
    #allocation3 [shape = 's32[1]{0}', space=sflag, size = 0x4, scoped, tag = 'scoped memory for tpu_custom_call.1']
    %9 = vsyncpa [#allocation3], 0
    // Predicated region
    $region2: #{tpu_custom_call.1} parent=1 // pred_check
      _
    $region3: #{tpu_custom_call.1} parent=1 // pred_check_branch
      %11 = sbr.rel (0) target = $region5
    $region4: #{tpu_custom_call.1} parent=1 // pred_region
      _
    $region5: #{tpu_custom_call.1} parent=1 // pred_fallthru
      _
    // Predicated region
    $region6: #{tpu_custom_call.1} parent=1 // pred_check
      _
    $region7: #{tpu_custom_call.1} parent=1 // pred_check_branch
      %13 = sbr.rel (0) target = $region9
    $region8: #{tpu_custom_call.1} parent=1 // pred_region
      _
    $region9: #{tpu_custom_call.1} parent=1 // pred_fallthru
      _
    // Predicated region
    $region10: #{tpu_custom_call.1} parent=1 // pred_check
      _
    $region11: #{tpu_custom_call.1} parent=1 // pred_check_branch
      %15 = sbr.rel (0) target = $region13
    $region12: #{tpu_custom_call.1} parent=1 // pred_region
      _
    $region13: #{tpu_custom_call.1} parent=1 // pred_fallthru
      _
    // Predicated region
    $region14: #{tpu_custom_call.1} parent=1 // pred_check
      _
    $region15: #{tpu_custom_call.1} parent=1 // pred_check_branch
      %17 = sbr.rel (0) target = $region17
    $region16: #{tpu_custom_call.1} parent=1 // pred_region
      _
    $region17: #{tpu_custom_call.1} parent=1 // pred_fallthru
      _
    %v18 = vld [vmem:[%s0] sm:$0xf]
    %v19 = vld [vmem:[%s0 + $0x4] sm:$0xf]
    %v20 = vld [vmem:[%s0 + $0x8] sm:$0xf]
    %v21 = vld [vmem:[%s0 + $0xc] sm:$0xf]
    %v22 = vld [vmem:[%s0 + $0x10] sm:$0xf]
    %v23 = vld [vmem:[%s0 + $0x14] sm:$0xf]
    %v24 = vld [vmem:[%s0 + $0x18] sm:$0xf]
    %v25 = vld [vmem:[%s0 + $0x1c] sm:$0xf]
    %v26 = vld [vmem:[%s0 + $0x20] sm:$0xf]
    %v27 = vld [vmem:[%s0 + $0x24] sm:$0xf]
    %v28 = vld [vmem:[%s0 + $0x28] sm:$0xf]
    %v29 = vld [vmem:[%s0 + $0x2c] sm:$0xf]
    %v30 = vld [vmem:[%s0 + $0x30] sm:$0xf]
    %v31 = vld [vmem:[%s0 + $0x34] sm:$0xf]
    %v32 = vld [vmem:[%s0 + $0x38] sm:$0xf]
    %v33 = vld [vmem:[%s0 + $0x3c] sm:$0xf]
    %v34 = vld [vmem:[%s0 + $0x40] sm:$0xf]
    %v35 = vld [vmem:[%s0 + $0x44] sm:$0xf]
    %v36 = vld [vmem:[%s0 + $0x48] sm:$0xf]
    %v37 = vld [vmem:[%s0 + $0x4c] sm:$0xf]
    %v38 = vld [vmem:[%s0 + $0x50] sm:$0xf]
    %v39 = vld [vmem:[%s0 + $0x54] sm:$0xf]
    %v40 = vld [vmem:[%s0 + $0x58] sm:$0xf]
    %v41 = vld [vmem:[%s0 + $0x5c] sm:$0xf]
    %v42 = vld [vmem:[%s0 + $0x60] sm:$0xf]
    %v43 = vld [vmem:[%s0 + $0x64] sm:$0xf]
    %v44 = vld [vmem:[%s0 + $0x68] sm:$0xf]
    %v45 = vld [vmem:[%s0 + $0x6c] sm:$0xf]
    %v46 = vld [vmem:[%s0 + $0x70] sm:$0xf]
    %v47 = vld [vmem:[%s0 + $0x74] sm:$0xf]
    %v48 = vld [vmem:[%s0 + $0x78] sm:$0xf]
    %v49 = vld [vmem:[%s0 + $0x7c] sm:$0xf]
    %v50 = vld [vmem:[%s1] sm:$0xf]
    %v51 = vld [vmem:[%s1 + $0x4] sm:$0xf]
    %v52 = vld [vmem:[%s1 + $0x8] sm:$0xf]
    %v53 = vld [vmem:[%s1 + $0xc] sm:$0xf]
    %v54 = vld [vmem:[%s1 + $0x10] sm:$0xf]
    %v55 = vld [vmem:[%s1 + $0x14] sm:$0xf]
    %v56 = vld [vmem:[%s1 + $0x18] sm:$0xf]
    %v57 = vld [vmem:[%s1 + $0x1c] sm:$0xf]
    %v58 = vld [vmem:[%s1 + $0x20] sm:$0xf]
    %v59 = vld [vmem:[%s1 + $0x24] sm:$0xf]
    %v60 = vld [vmem:[%s1 + $0x28] sm:$0xf]
    %v61 = vld [vmem:[%s1 + $0x2c] sm:$0xf]
    %v62 = vld [vmem:[%s1 + $0x30] sm:$0xf]
    %v63 = vld [vmem:[%s1 + $0x34] sm:$0xf]
    %v64 = vld [vmem:[%s1 + $0x38] sm:$0xf]
    %v65 = vld [vmem:[%s1 + $0x3c] sm:$0xf]
    %v66 = vld [vmem:[%s2] sm:$0x1]
    %v68 = vperm.slane %v66, 0
    %v102 = vunpack.c.l.b16 %v18
    %v103 = vunpack.c.l.b16 %v19
    %v104 = vunpack.c.l.b16 %v20
    %v105 = vunpack.c.l.b16 %v21
    %v106 = vunpack.c.l.b16 %v22
    %v107 = vunpack.c.l.b16 %v23
    %v108 = vunpack.c.l.b16 %v24
    %v109 = vunpack.c.l.b16 %v25
    %v110 = vunpack.c.l.b16 %v26
    %v111 = vunpack.c.l.b16 %v27
    %v112 = vunpack.c.l.b16 %v28
    %v113 = vunpack.c.l.b16 %v29
    %v114 = vunpack.c.l.b16 %v30
    %v115 = vunpack.c.l.b16 %v31
    %v116 = vunpack.c.l.b16 %v32
    %v117 = vunpack.c.l.b16 %v33
    %v118 = vunpack.c.l.b16 %v34
    %v119 = vunpack.c.l.b16 %v35
    %v120 = vunpack.c.l.b16 %v36
    %v121 = vunpack.c.l.b16 %v37
    %v122 = vunpack.c.l.b16 %v38
    %v123 = vunpack.c.l.b16 %v39
    %v124 = vunpack.c.l.b16 %v40
    %v125 = vunpack.c.l.b16 %v41
    %v126 = vunpack.c.l.b16 %v42
    %v127 = vunpack.c.l.b16 %v43
    %v128 = vunpack.c.l.b16 %v44
    %v129 = vunpack.c.l.b16 %v45
    %v130 = vunpack.c.l.b16 %v46
    %v131 = vunpack.c.l.b16 %v47
    %v132 = vunpack.c.l.b16 %v48
    %v133 = vunpack.c.l.b16 %v49
    %v134 = vpack.c.b16 %v103, %v102
    %v135 = vpack.c.b16 %v105, %v104
    %v136 = vpack.c.b16 %v107, %v106
    %v137 = vpack.c.b16 %v109, %v108
    %v138 = vpack.c.b16 %v111, %v110
    %v139 = vpack.c.b16 %v113, %v112
    %v140 = vpack.c.b16 %v115, %v114
    %v141 = vpack.c.b16 %v117, %v116
    %v142 = vpack.c.b16 %v119, %v118
    %v143 = vpack.c.b16 %v121, %v120
    %v144 = vpack.c.b16 %v123, %v122
    %v145 = vpack.c.b16 %v125, %v124
    %v146 = vpack.c.b16 %v127, %v126
    %v147 = vpack.c.b16 %v129, %v128
    %v148 = vpack.c.b16 %v131, %v130
    %v149 = vpack.c.b16 %v133, %v132
    %v182 = vunpack.c.l.b16 %v50
    %v183 = vunpack.c.l.b16 %v51
    %v184 = vunpack.c.l.b16 %v52
    %v185 = vunpack.c.l.b16 %v53
    %v186 = vunpack.c.l.b16 %v54
    %v187 = vunpack.c.l.b16 %v55
    %v188 = vunpack.c.l.b16 %v56
    %v189 = vunpack.c.l.b16 %v57
    %v190 = vunpack.c.l.b16 %v58
    %v191 = vunpack.c.l.b16 %v59
    %v192 = vunpack.c.l.b16 %v60
    %v193 = vunpack.c.l.b16 %v61
    %v194 = vunpack.c.l.b16 %v62
    %v195 = vunpack.c.l.b16 %v63
    %v196 = vunpack.c.l.b16 %v64
    %v197 = vunpack.c.l.b16 %v65
    %v198 = vpack.c.b16 %v183, %v182
    %v199 = vpack.c.b16 %v185, %v184
    %v200 = vpack.c.b16 %v187, %v186
    %v201 = vpack.c.b16 %v189, %v188
    %v202 = vpack.c.b16 %v191, %v190
    %v203 = vpack.c.b16 %v193, %v192
    %v204 = vpack.c.b16 %v195, %v194
    %v205 = vpack.c.b16 %v197, %v196
    %214 = vmatpush.bf16.msra.mxu0 %v205
    %215 = vmatpush.bf16.msra.mxu0 %v204
    %216 = vmatpush.bf16.msra.mxu0 %v203
    %217 = vmatpush.bf16.msra.mxu0 %v202
    %218 = vmatpush.bf16.msra.mxu0 %v201
    %219 = vmatpush.bf16.msra.mxu0 %v200
    %220 = vmatpush.bf16.msra.mxu0 %v199
    %221 = vmatpush.bf16.msra.mxu0 %v198
    %222 = vmatmul.bf16.gmra.mxu0 %v134
    %v223 = vpop.f32.mrf.mxu0
    %v224 = vadd.f32 %v68, %v223
    %v225 = vpop.f32.mrf.mxu0
    %v226 = vadd.f32 %v68, %v225
    %227 = vmatmul.bf16.gmra.mxu0 %v135
    %v228 = vpop.f32.mrf.mxu0
    %v229 = vadd.f32 %v68, %v228
    %v230 = vpop.f32.mrf.mxu0
    %v231 = vadd.f32 %v68, %v230
    %232 = vmatmul.bf16.gmra.mxu0 %v136
    %v233 = vpop.f32.mrf.mxu0
    %v234 = vadd.f32 %v68, %v233
    %v235 = vpop.f32.mrf.mxu0
    %v236 = vadd.f32 %v68, %v235
    %237 = vmatmul.bf16.gmra.mxu0 %v137
    %v238 = vpop.f32.mrf.mxu0
    %v239 = vadd.f32 %v68, %v238
    %v240 = vpop.f32.mrf.mxu0
    %v241 = vadd.f32 %v68, %v240
    %242 = vmatmul.bf16.gmra.mxu0 %v138
    %v243 = vpop.f32.mrf.mxu0
    %v244 = vadd.f32 %v68, %v243
    %v245 = vpop.f32.mrf.mxu0
    %v246 = vadd.f32 %v68, %v245
    %247 = vmatmul.bf16.gmra.mxu0 %v139
    %v248 = vpop.f32.mrf.mxu0
    %v249 = vadd.f32 %v68, %v248
    %v250 = vpop.f32.mrf.mxu0
    %v251 = vadd.f32 %v68, %v250
    %252 = vmatmul.bf16.gmra.mxu0 %v140
    %v253 = vpop.f32.mrf.mxu0
    %v254 = vadd.f32 %v68, %v253
    %v255 = vpop.f32.mrf.mxu0
    %v256 = vadd.f32 %v68, %v255
    %257 = vmatmul.bf16.gmra.mxu0 %v141
    %v258 = vpop.f32.mrf.mxu0
    %v259 = vadd.f32 %v68, %v258
    %v260 = vpop.f32.mrf.mxu0
    %v261 = vadd.f32 %v68, %v260
    %262 = vmatmul.bf16.gmra.mxu0 %v142
    %v263 = vpop.f32.mrf.mxu0
    %v264 = vadd.f32 %v68, %v263
    %v265 = vpop.f32.mrf.mxu0
    %v266 = vadd.f32 %v68, %v265
    %267 = vmatmul.bf16.gmra.mxu0 %v143
    %v268 = vpop.f32.mrf.mxu0
    %v269 = vadd.f32 %v68, %v268
    %v270 = vpop.f32.mrf.mxu0
    %v271 = vadd.f32 %v68, %v270
    %272 = vmatmul.bf16.gmra.mxu0 %v144
    %v273 = vpop.f32.mrf.mxu0
    %v274 = vadd.f32 %v68, %v273
    %v275 = vpop.f32.mrf.mxu0
    %v276 = vadd.f32 %v68, %v275
    %277 = vmatmul.bf16.gmra.mxu0 %v145
    %v278 = vpop.f32.mrf.mxu0
    %v279 = vadd.f32 %v68, %v278
    %v280 = vpop.f32.mrf.mxu0
    %v281 = vadd.f32 %v68, %v280
    %282 = vmatmul.bf16.gmra.mxu0 %v146
    %v283 = vpop.f32.mrf.mxu0
    %v284 = vadd.f32 %v68, %v283
    %v285 = vpop.f32.mrf.mxu0
    %v286 = vadd.f32 %v68, %v285
    %287 = vmatmul.bf16.gmra.mxu0 %v147
    %v288 = vpop.f32.mrf.mxu0
    %v289 = vadd.f32 %v68, %v288
    %v290 = vpop.f32.mrf.mxu0
    %v291 = vadd.f32 %v68, %v290
    %292 = vmatmul.bf16.gmra.mxu0 %v148
    %v293 = vpop.f32.mrf.mxu0
    %v294 = vadd.f32 %v68, %v293
    %v295 = vpop.f32.mrf.mxu0
    %v296 = vadd.f32 %v68, %v295
    %297 = vmatmul.bf16.gmra.mxu0 %v149
    %v298 = vpop.f32.mrf.mxu0
    %v299 = vadd.f32 %v68, %v298
    %v300 = vpop.f32.mrf.mxu0
    %v301 = vadd.f32 %v68, %v300
    %302 = vdwg.mxu0
    %v303 = vld [vmem:[%s3] sm:$0xff]
    %v304 = vld [vmem:[%s3 + $0x8] sm:$0xff]
    %v305 = vld [vmem:[%s3 + $0x10] sm:$0xff]
    %v306 = vld [vmem:[%s3 + $0x18] sm:$0xff]
    %v307 = vld [vmem:[%s3 + $0x20] sm:$0xff]
    %v308 = vld [vmem:[%s3 + $0x28] sm:$0xff]
    %v309 = vld [vmem:[%s3 + $0x30] sm:$0xff]
    %v310 = vld [vmem:[%s3 + $0x38] sm:$0xff]
    %v311 = vld [vmem:[%s3 + $0x40] sm:$0xff]
    %v312 = vld [vmem:[%s3 + $0x48] sm:$0xff]
    %v313 = vld [vmem:[%s3 + $0x50] sm:$0xff]
    %v314 = vld [vmem:[%s3 + $0x58] sm:$0xff]
    %v315 = vld [vmem:[%s3 + $0x60] sm:$0xff]
    %v316 = vld [vmem:[%s3 + $0x68] sm:$0xff]
    %v317 = vld [vmem:[%s3 + $0x70] sm:$0xff]
    %v318 = vld [vmem:[%s3 + $0x78] sm:$0xff]
    %v319 = vld [vmem:[%s3 + $0x80] sm:$0xff]
    %v320 = vld [vmem:[%s3 + $0x88] sm:$0xff]
    %v321 = vld [vmem:[%s3 + $0x90] sm:$0xff]
    %v322 = vld [vmem:[%s3 + $0x98] sm:$0xff]
    %v323 = vld [vmem:[%s3 + $0xa0] sm:$0xff]
    %v324 = vld [vmem:[%s3 + $0xa8] sm:$0xff]
    %v325 = vld [vmem:[%s3 + $0xb0] sm:$0xff]
    %v326 = vld [vmem:[%s3 + $0xb8] sm:$0xff]
    %v327 = vld [vmem:[%s3 + $0xc0] sm:$0xff]
    %v328 = vld [vmem:[%s3 + $0xc8] sm:$0xff]
    %v329 = vld [vmem:[%s3 + $0xd0] sm:$0xff]
    %v330 = vld [vmem:[%s3 + $0xd8] sm:$0xff]
    %v331 = vld [vmem:[%s3 + $0xe0] sm:$0xff]
    %v332 = vld [vmem:[%s3 + $0xe8] sm:$0xff]
    %v333 = vld [vmem:[%s3 + $0xf0] sm:$0xff]
    %v334 = vld [vmem:[%s3 + $0xf8] sm:$0xff]
    %336 = vset.pattern.permute.xlu0 0
    %337 = vperm.xlu0 %336, %v303
    %v338 = vpop.permute.xlu0 %337
    %341 = vset.pattern.permute.xlu0 0
    %342 = vperm.xlu0 %341, %v304
    %v343 = vpop.permute.xlu0 %342
    %346 = vset.pattern.permute.xlu0 0
    %347 = vperm.xlu0 %346, %v305
    %v348 = vpop.permute.xlu0 %347
    %351 = vset.pattern.permute.xlu0 0
    %352 = vperm.xlu0 %351, %v306
    %v353 = vpop.permute.xlu0 %352
    %356 = vset.pattern.permute.xlu0 0
    %357 = vperm.xlu0 %356, %v307
    %v358 = vpop.permute.xlu0 %357
    %361 = vset.pattern.permute.xlu0 0
    %362 = vperm.xlu0 %361, %v308
    %v363 = vpop.permute.xlu0 %362
    %366 = vset.pattern.permute.xlu0 0
    %367 = vperm.xlu0 %366, %v309
    %v368 = vpop.permute.xlu0 %367
    %371 = vset.pattern.permute.xlu0 0
    %372 = vperm.xlu0 %371, %v310
    %v373 = vpop.permute.xlu0 %372
    %376 = vset.pattern.permute.xlu0 0
    %377 = vperm.xlu0 %376, %v311
    %v378 = vpop.permute.xlu0 %377
    %381 = vset.pattern.permute.xlu0 0
    %382 = vperm.xlu0 %381, %v312
    %v383 = vpop.permute.xlu0 %382
    %386 = vset.pattern.permute.xlu0 0
    %387 = vperm.xlu0 %386, %v313
    %v388 = vpop.permute.xlu0 %387
    %391 = vset.pattern.permute.xlu0 0
    %392 = vperm.xlu0 %391, %v314
    %v393 = vpop.permute.xlu0 %392
    %396 = vset.pattern.permute.xlu0 0
    %397 = vperm.xlu0 %396, %v315
    %v398 = vpop.permute.xlu0 %397
    %401 = vset.pattern.permute.xlu0 0
    %402 = vperm.xlu0 %401, %v316
    %v403 = vpop.permute.xlu0 %402
    %406 = vset.pattern.permute.xlu0 0
    %407 = vperm.xlu0 %406, %v317
    %v408 = vpop.permute.xlu0 %407
    %411 = vset.pattern.permute.xlu0 0
    %412 = vperm.xlu0 %411, %v318
    %v413 = vpop.permute.xlu0 %412
    %416 = vset.pattern.permute.xlu0 0
    %417 = vperm.xlu0 %416, %v319
    %v418 = vpop.permute.xlu0 %417
    %421 = vset.pattern.permute.xlu0 0
    %422 = vperm.xlu0 %421, %v320
    %v423 = vpop.permute.xlu0 %422
    %426 = vset.pattern.permute.xlu0 0
    %427 = vperm.xlu0 %426, %v321
    %v428 = vpop.permute.xlu0 %427
    %431 = vset.pattern.permute.xlu0 0
    %432 = vperm.xlu0 %431, %v322
    %v433 = vpop.permute.xlu0 %432
    %436 = vset.pattern.permute.xlu0 0
    %437 = vperm.xlu0 %436, %v323
    %v438 = vpop.permute.xlu0 %437
    %441 = vset.pattern.permute.xlu0 0
    %442 = vperm.xlu0 %441, %v324
    %v443 = vpop.permute.xlu0 %442
    %446 = vset.pattern.permute.xlu0 0
    %447 = vperm.xlu0 %446, %v325
    %v448 = vpop.permute.xlu0 %447
    %451 = vset.pattern.permute.xlu0 0
    %452 = vperm.xlu0 %451, %v326
    %v453 = vpop.permute.xlu0 %452
    %456 = vset.pattern.permute.xlu0 0
    %457 = vperm.xlu0 %456, %v327
    %v458 = vpop.permute.xlu0 %457
    %461 = vset.pattern.permute.xlu0 0
    %462 = vperm.xlu0 %461, %v328
    %v463 = vpop.permute.xlu0 %462
    %466 = vset.pattern.permute.xlu0 0
    %467 = vperm.xlu0 %466, %v329
    %v468 = vpop.permute.xlu0 %467
    %471 = vset.pattern.permute.xlu0 0
    %472 = vperm.xlu0 %471, %v330
    %v473 = vpop.permute.xlu0 %472
    %476 = vset.pattern.permute.xlu0 0
    %477 = vperm.xlu0 %476, %v331
    %v478 = vpop.permute.xlu0 %477
    %481 = vset.pattern.permute.xlu0 0
    %482 = vperm.xlu0 %481, %v332
    %v483 = vpop.permute.xlu0 %482
    %486 = vset.pattern.permute.xlu0 0
    %487 = vperm.xlu0 %486, %v333
    %v488 = vpop.permute.xlu0 %487
    %491 = vset.pattern.permute.xlu0 0
    %492 = vperm.xlu0 %491, %v334
    %v493 = vpop.permute.xlu0 %492
    %v495 = vmul.f32 %v224, %v338
    %v496 = vmul.f32 %v226, %v343
    %v497 = vmul.f32 %v229, %v348
    %v498 = vmul.f32 %v231, %v353
    %v499 = vmul.f32 %v234, %v358
    %v500 = vmul.f32 %v236, %v363
    %v501 = vmul.f32 %v239, %v368
    %v502 = vmul.f32 %v241, %v373
    %v503 = vmul.f32 %v244, %v378
    %v504 = vmul.f32 %v246, %v383
    %v505 = vmul.f32 %v249, %v388
    %v506 = vmul.f32 %v251, %v393
    %v507 = vmul.f32 %v254, %v398
    %v508 = vmul.f32 %v256, %v403
    %v509 = vmul.f32 %v259, %v408
    %v510 = vmul.f32 %v261, %v413
    %v511 = vmul.f32 %v264, %v418
    %v512 = vmul.f32 %v266, %v423
    %v513 = vmul.f32 %v269, %v428
    %v514 = vmul.f32 %v271, %v433
    %v515 = vmul.f32 %v274, %v438
    %v516 = vmul.f32 %v276, %v443
    %v517 = vmul.f32 %v279, %v448
    %v518 = vmul.f32 %v281, %v453
    %v519 = vmul.f32 %v284, %v458
    %v520 = vmul.f32 %v286, %v463
    %v521 = vmul.f32 %v289, %v468
    %v522 = vmul.f32 %v291, %v473
    %v523 = vmul.f32 %v294, %v478
    %v524 = vmul.f32 %v296, %v483
    %v525 = vmul.f32 %v299, %v488
    %v526 = vmul.f32 %v301, %v493
    %v527 = vpack.c.bf16 %v495, %v495
    %v528 = vpack.c.bf16 %v496, %v496
    %v529 = vpack.c.bf16 %v497, %v497
    %v530 = vpack.c.bf16 %v498, %v498
    %v531 = vpack.c.bf16 %v499, %v499
    %v532 = vpack.c.bf16 %v500, %v500
    %v533 = vpack.c.bf16 %v501, %v501
    %v534 = vpack.c.bf16 %v502, %v502
    %v535 = vpack.c.bf16 %v503, %v503
    %v536 = vpack.c.bf16 %v504, %v504
    %v537 = vpack.c.bf16 %v505, %v505
    %v538 = vpack.c.bf16 %v506, %v506
    %v539 = vpack.c.bf16 %v507, %v507
    %v540 = vpack.c.bf16 %v508, %v508
    %v541 = vpack.c.bf16 %v509, %v509
    %v542 = vpack.c.bf16 %v510, %v510
    %v543 = vpack.c.bf16 %v511, %v511
    %v544 = vpack.c.bf16 %v512, %v512
    %v545 = vpack.c.bf16 %v513, %v513
    %v546 = vpack.c.bf16 %v514, %v514
    %v547 = vpack.c.bf16 %v515, %v515
    %v548 = vpack.c.bf16 %v516, %v516
    %v549 = vpack.c.bf16 %v517, %v517
    %v550 = vpack.c.bf16 %v518, %v518
    %v551 = vpack.c.bf16 %v519, %v519
    %v552 = vpack.c.bf16 %v520, %v520
    %v553 = vpack.c.bf16 %v521, %v521
    %v554 = vpack.c.bf16 %v522, %v522
    %v555 = vpack.c.bf16 %v523, %v523
    %v556 = vpack.c.bf16 %v524, %v524
    %v557 = vpack.c.bf16 %v525, %v525
    %v558 = vpack.c.bf16 %v526, %v526
    %559 = vst [vmem:[#allocation2] sm:$0xf] %v527
    %560 = vst [vmem:[#allocation2 + $0x4] sm:$0xf] %v528
    %561 = vst [vmem:[#allocation2 + $0x8] sm:$0xf] %v529
    %562 = vst [vmem:[#allocation2 + $0xc] sm:$0xf] %v530
    %563 = vst [vmem:[#allocation2 + $0x10] sm:$0xf] %v531
    %564 = vst [vmem:[#allocation2 + $0x14] sm:$0xf] %v532
    %565 = vst [vmem:[#allocation2 + $0x18] sm:$0xf] %v533
    %566 = vst [vmem:[#allocation2 + $0x1c] sm:$0xf] %v534
    %567 = vst [vmem:[#allocation2 + $0x20] sm:$0xf] %v535
    %568 = vst [vmem:[#allocation2 + $0x24] sm:$0xf] %v536
    %569 = vst [vmem:[#allocation2 + $0x28] sm:$0xf] %v537
    %570 = vst [vmem:[#allocation2 + $0x2c] sm:$0xf] %v538
    %571 = vst [vmem:[#allocation2 + $0x30] sm:$0xf] %v539
    %572 = vst [vmem:[#allocation2 + $0x34] sm:$0xf] %v540
    %573 = vst [vmem:[#allocation2 + $0x38] sm:$0xf] %v541
    %574 = vst [vmem:[#allocation2 + $0x3c] sm:$0xf] %v542
    %575 = vst [vmem:[#allocation2 + $0x40] sm:$0xf] %v543
    %576 = vst [vmem:[#allocation2 + $0x44] sm:$0xf] %v544
    %577 = vst [vmem:[#allocation2 + $0x48] sm:$0xf] %v545
    %578 = vst [vmem:[#allocation2 + $0x4c] sm:$0xf] %v546
    %579 = vst [vmem:[#allocation2 + $0x50] sm:$0xf] %v547
    %580 = vst [vmem:[#allocation2 + $0x54] sm:$0xf] %v548
    %581 = vst [vmem:[#allocation2 + $0x58] sm:$0xf] %v549
    %582 = vst [vmem:[#allocation2 + $0x5c] sm:$0xf] %v550
    %583 = vst [vmem:[#allocation2 + $0x60] sm:$0xf] %v551
    %584 = vst [vmem:[#allocation2 + $0x64] sm:$0xf] %v552
    %585 = vst [vmem:[#allocation2 + $0x68] sm:$0xf] %v553
    %586 = vst [vmem:[#allocation2 + $0x6c] sm:$0xf] %v554
    %587 = vst [vmem:[#allocation2 + $0x70] sm:$0xf] %v555
    %588 = vst [vmem:[#allocation2 + $0x74] sm:$0xf] %v556
    %589 = vst [vmem:[#allocation2 + $0x78] sm:$0xf] %v557
    %590 = vst [vmem:[#allocation2 + $0x7c] sm:$0xf] %v558
    // Predicated region
    $region18: #{tpu_custom_call.1} parent=1 // pred_check
      _
    $region19: #{tpu_custom_call.1} parent=1 // pred_check_branch
      %592 = sbr.rel (0) target = $region21
    $region20: #{tpu_custom_call.1} parent=1 // pred_region
      %594 = vsyncadd [#allocation3], 0
      %s595 = sshll.u32 [#allocation2], 4
      %s596 = int_to_ptr.vmem [resolvable:$true] %s595
      %s597 = sshll.u32 %s4, 4
      %s598 = int_to_ptr.hbm [resolvable:$true] %s597
      %603 = dma.vmem_to_hbm [thread:$0]  %s596, 2048, %s598, [#allocation3], 64, 64, 4
    $region21: #{tpu_custom_call.1} parent=1 // pred_fallthru
      _
    // Predicated region
    $region22: #{tpu_custom_call.1} parent=1 // pred_check
      _
    $region23: #{tpu_custom_call.1} parent=1 // pred_check_branch
      %605 = sbr.rel (0) target = $region25
    $region24: #{tpu_custom_call.1} parent=1 // pred_region
      %607 = dma.done [#allocation3], 2048
    $region25: #{tpu_custom_call.1} parent=1 // pred_fallthru
      _
    %608 = vsyncpa [#allocation3], 1

</llo_original>
